<compile_context>
chip_gen: v7x
topology: tpu7x:2x2x1
jax: 0.10.0
libtpu: 0.0.40
codegen_flags: <defaults>
</compile_context>

<pallas_src>
import math
import functools

import jax
import jax.numpy as jnp
from jax import lax
from jax.experimental import pallas as pl
from jax.experimental.pallas import tpu as pltpu


MATMUL_DTYPE = jnp.bfloat16      # MXU operand / activation-carry dtype (accumulation is f32)


def _vmem_capacity_bytes():
    """Physical VMEM per core (generation-aware); falls back to 128 MiB."""
    try:
        return int(pltpu.get_tpu_info().vmem_capacity_bytes)
    except Exception:
        return 128 * 1024 * 1024


_VMEM_CAP = _vmem_capacity_bytes()
_BIG_VMEM = _VMEM_CAP >= 100 * 1024 * 1024            # v5e / v6e (128 MiB) vs v7x (64 MiB)
VMEM_LIMIT = min(int(0.75 * _VMEM_CAP), 100 * 1024 * 1024)   # leave double-buffer headroom
MAX_ROW_TILE = 1024 if _BIG_VMEM else 512              # prenet / FFN row tile
ATTN_TQ_TARGET = 512 if _BIG_VMEM else 256             # attention query-row tile
ATTN_TK_TARGET = 512                                   # attention KV tile (online softmax)


def _full_spec(arr):
    """Whole-array block that stays resident across the grid (constant block index)."""
    zeros = (0,) * arr.ndim
    return pl.BlockSpec(arr.shape, lambda *_: zeros)
    # TODO(synk): single-buffer these constant-index weight blocks (pipeline_mode=
    #             pl.Buffered(1)) to halve resident weight VMEM, once validated on v7x.


def _pick_tile(size, target):
    """Largest power-of-two-ish candidate <= target that divides `size`; else `size`."""
    if size <= target:
        return size
    t = target
    while t >= 8:
        if size % t == 0:
            return t
        t //= 2
    return size   # TODO(synk): ragged-tile masking for lengths with no small divisor


# ----------------------------- Pallas kernels ------------------------------ #

def _prenet_embed_kernel(mel_ref, ids_ref, pos_ref,
                         w1_ref, b1_ref, w2_ref, b2_ref, wn_ref, bn_ref, emb_ref,
                         o_ref):
    """Fused prenet (Linear+ReLU x2) -> norm Linear -> one-hot embedding gather
    (table pre-scaled by sqrt(E)) + positional add, for one (batch, row-tile) block."""
    x = mel_ref[0].astype(MATMUL_DTYPE)                                # (ts, num_mels)
    h = jnp.dot(x, w1_ref[...], preferred_element_type=jnp.float32) + b1_ref[...]
    h = jnp.maximum(h, 0.0)
    h = jnp.dot(h.astype(MATMUL_DTYPE), w2_ref[...],
                preferred_element_type=jnp.float32) + b2_ref[...]
    h = jnp.maximum(h, 0.0)
    mel = jnp.dot(h.astype(MATMUL_DTYPE), wn_ref[...],
                  preferred_element_type=jnp.float32) + bn_ref[...]    # (ts, E) f32

    # Fused embedding gather on the MXU: one_hot(ids) @ (sqrt(E) * table).
    ids = ids_ref[0]                                                   # (ts, 1) int32
    ts, vocab = ids.shape[0], emb_ref.shape[0]
    onehot = jnp.where(ids == lax.broadcasted_iota(jnp.int32, (ts, vocab), 1),
                       1.0, 0.0).astype(MATMUL_DTYPE)                  # (ts, V)
    emb = jnp.dot(onehot, emb_ref[...], preferred_element_type=jnp.float32)  # (ts, E)

    o_ref[0] = (emb + pos_ref[0] + mel).astype(o_ref.dtype)


def _attn_ln_kernel(x_ref, mask_ref, padb_ref,
                    wqkv_ref, bqkv_ref, wo_ref, bo_ref, g_ref, b_ref,
                    o_ref, qkv_scr, oc_scr, *, nhead, tq, tk):
    """One (batch, q-tile) step: QKV proj (once per batch element, bf16 scratch) ->
    KV-tiled online-softmax attention -> lane-concat heads -> single out-proj ->
    +residual -> LayerNorm1."""
    qi = pl.program_id(1)
    S, E = x_ref.shape[1], x_ref.shape[2]
    Dh = E // nhead
    nk = S // tk

    # QKV projection for the whole sequence, computed once per batch element.
    # The 1/sqrt(Dh) scale is pre-folded into the Q columns of wqkv; stored bf16.
    @pl.when(qi == 0)
    def _():
        qkv_scr[...] = (jnp.dot(x_ref[0], wqkv_ref[...],
                                preferred_element_type=jnp.float32)
                        + bqkv_ref[...]).astype(qkv_scr.dtype)

    row0 = pl.multiple_of(qi * tq, tq)
    x_q = x_ref[0, pl.ds(row0, tq), :]                                 # (tq, E) residual
    # Additive bias: attn-mask rows for this q tile + key-padding bias (1, S).
    bias_q = mask_ref[...] + padb_ref[0]                               # (tq, S) f32

    for h in range(nhead):
        q = qkv_scr[pl.ds(row0, tq), h * Dh:(h + 1) * Dh]              # (tq, Dh) bf16
        m = jnp.full((tq, 1), -jnp.inf, jnp.float32)
        l = jnp.zeros((tq, 1), jnp.float32)
        acc = jnp.zeros((tq, Dh), jnp.float32)
        for t in range(nk):                                            # online softmax over KV tiles
            k0 = t * tk
            k = qkv_scr[pl.ds(k0, tk), E + h * Dh:E + (h + 1) * Dh]    # (tk, Dh)
            v = qkv_scr[pl.ds(k0, tk), 2 * E + h * Dh:2 * E + (h + 1) * Dh]
            # q @ k^T without an explicit transpose: contract the last dims on the MXU.
            s = lax.dot_general(q, k, (((1,), (1,)), ((), ())),
                                preferred_element_type=jnp.float32)    # (tq, tk)
            s = s + bias_q[:, k0:k0 + tk]
            m_new = jnp.maximum(m, jnp.max(s, axis=-1, keepdims=True))
            alpha = jnp.exp(m - m_new)
            p = jnp.exp(s - m_new)
            l = alpha * l + jnp.sum(p, axis=-1, keepdims=True)
            acc = alpha * acc + jnp.dot(p.astype(MATMUL_DTYPE), v,
                                        preferred_element_type=jnp.float32)
            m = m_new
        inv = pl.reciprocal(l, approx=True)                            # EUP slot (~free)
        oc_scr[:, h * Dh:(h + 1) * Dh] = (acc * inv).astype(oc_scr.dtype)

    # Single full-K out-projection over the lane-concatenated head outputs.
    attn = jnp.dot(oc_scr[...], wo_ref[...],
                   preferred_element_type=jnp.float32) + bo_ref[...]   # (tq, E) f32

    # Residual + LayerNorm1 (post-norm, eps=1e-5), f32 math.
    y = x_q.astype(jnp.float32) + attn
    mu = jnp.mean(y, axis=-1, keepdims=True)
    var = jnp.mean((y - mu) ** 2, axis=-1, keepdims=True)
    yn = (y - mu) * lax.rsqrt(var + 1e-5)
    o_ref[0] = (yn * g_ref[...] + b_ref[...]).astype(o_ref.dtype)
    # TODO(synk): head-major (nhead, S, Dh) QKV scratch / batched dot_general to avoid
    #             Dh-wide lane slices when Dh < 128.


def _ffn_ln_kernel(x_ref, w1_ref, b1_ref, w2_ref, b2_ref, g_ref, b_ref, o_ref):
    """Fused FFN1+ReLU -> FFN2 -> +residual -> LayerNorm2 on a row tile."""
    x = x_ref[...]                                                     # (tm, E) bf16
    h = jnp.dot(x, w1_ref[...], preferred_element_type=jnp.float32) + b1_ref[...]
    h = jnp.maximum(h, 0.0)
    y = jnp.dot(h.astype(MATMUL_DTYPE), w2_ref[...],
                preferred_element_type=jnp.float32) + b2_ref[...]
    y = x.astype(jnp.float32) + y
    mu = jnp.mean(y, axis=-1, keepdims=True)
    var = jnp.mean((y - mu) ** 2, axis=-1, keepdims=True)
    yn = (y - mu) * lax.rsqrt(var + 1e-5)
    o_ref[...] = (yn * g_ref[...] + b_ref[...]).astype(o_ref.dtype)


# ------------------------------ kernel wrappers ----------------------------- #

def prenet_embed(mel_input, ids, pos_b, p):
    B, S, num_mels = mel_input.shape
    E = p["norm_w"].shape[1]
    ts = S if S <= MAX_ROW_TILE else MAX_ROW_TILE
    return pl.pallas_call(
        _prenet_embed_kernel,
        out_shape=jax.ShapeDtypeStruct((B, S, E), MATMUL_DTYPE),
        grid=(B, pl.cdiv(S, ts)),
        in_specs=[
            pl.BlockSpec((1, ts, num_mels), lambda b, si: (b, si, 0)),
            pl.BlockSpec((1, ts, 1), lambda b, si: (b, si, 0)),
            pl.BlockSpec((1, 1, E), lambda b, si: (b, 0, 0)),
            _full_spec(p["prenet_w1"]), _full_spec(p["prenet_b1"]),
            _full_spec(p["prenet_w2"]), _full_spec(p["prenet_b2"]),
            _full_spec(p["norm_w"]), _full_spec(p["norm_b"]),
            _full_spec(p["emb_table"]),
        ],
        out_specs=pl.BlockSpec((1, ts, E), lambda b, si: (b, si, 0)),
        compiler_params=pltpu.CompilerParams(
            dimension_semantics=("parallel", "parallel"),
            vmem_limit_bytes=VMEM_LIMIT),
    )(mel_input, ids, pos_b, p["prenet_w1"], p["prenet_b1"],
      p["prenet_w2"], p["prenet_b2"], p["norm_w"], p["norm_b"], p["emb_table"])


def attn_layer(x, attn_mask, pad_bias, lyr, nhead):
    B, S, E = x.shape
    tq = _pick_tile(S, ATTN_TQ_TARGET)
    tk = _pick_tile(S, ATTN_TK_TARGET)
    nq = S // tq
    return pl.pallas_call(
        functools.partial(_attn_ln_kernel, nhead=nhead, tq=tq, tk=tk),
        out_shape=jax.ShapeDtypeStruct((B, S, E), MATMUL_DTYPE),
        grid=(B, nq),
        in_specs=[
            pl.BlockSpec((1, S, E), lambda b, q: (b, 0, 0)),    # full seq, resident per b
            pl.BlockSpec((tq, S), lambda b, q: (q, 0)),         # mask rows for this q tile
            pl.BlockSpec((1, 1, S), lambda b, q: (b, 0, 0)),    # key-padding bias
            _full_spec(lyr["in_proj_w"]), _full_spec(lyr["in_proj_b"]),
            _full_spec(lyr["out_proj_w"]), _full_spec(lyr["out_proj_b"]),
            _full_spec(lyr["ln1_g"]), _full_spec(lyr["ln1_b"]),
        ],
        out_specs=pl.BlockSpec((1, tq, E), lambda b, q: (b, q, 0)),
        scratch_shapes=[pltpu.VMEM((S, 3 * E), MATMUL_DTYPE),   # QKV, persists across q steps
                        pltpu.VMEM((tq, E), MATMUL_DTYPE)],     # concatenated head outputs
        compiler_params=pltpu.CompilerParams(
            dimension_semantics=("parallel", "arbitrary"),
            vmem_limit_bytes=VMEM_LIMIT),
    )(x, attn_mask, pad_bias, lyr["in_proj_w"], lyr["in_proj_b"],
      lyr["out_proj_w"], lyr["out_proj_b"], lyr["ln1_g"], lyr["ln1_b"])


def ffn_layer(x, lyr):
    B, S, E = x.shape
    rows = B * S
    tm = rows if rows <= MAX_ROW_TILE else MAX_ROW_TILE
    xf = x.reshape(rows, E)
    y = pl.pallas_call(
        _ffn_ln_kernel,
        out_shape=jax.ShapeDtypeStruct((rows, E), MATMUL_DTYPE),
        grid=(pl.cdiv(rows, tm),),
        in_specs=[
            pl.BlockSpec((tm, E), lambda i: (i, 0)),
            _full_spec(lyr["ffn_w1"]), _full_spec(lyr["ffn_b1"]),
            _full_spec(lyr["ffn_w2"]), _full_spec(lyr["ffn_b2"]),
            _full_spec(lyr["ln2_g"]), _full_spec(lyr["ln2_b"]),
        ],
        out_specs=pl.BlockSpec((tm, E), lambda i: (i, 0)),
        compiler_params=pltpu.CompilerParams(
            dimension_semantics=("parallel",), vmem_limit_bytes=VMEM_LIMIT),
    )(xf, lyr["ffn_w1"], lyr["ffn_b1"], lyr["ffn_w2"], lyr["ffn_b2"],
      lyr["ln2_g"], lyr["ln2_b"])
    return y.reshape(B, S, E)


# ------------------------- parameter initialization ------------------------ #

def init_params(key, *, num_mels, num_hidden, embedding_size, posmel_size,
                nhead, num_encoder_layers, dim_feedforward, maxlen=5000):
    assert embedding_size == 2 * num_hidden, "norm Linear output must match embedding_size"
    assert embedding_size % nhead == 0
    E, FF = embedding_size, dim_feedforward

    def nrm(k, shape, scale=0.1):
        return (scale * jax.random.normal(k, shape)).astype(jnp.float32)

    keys = jax.random.split(key, 8 + 6 * num_encoder_layers)
    ki = iter(range(len(keys)))

    params = {
        # Prenet: Linear(num_mels, 2H) -> ReLU -> Linear(2H, H) -> ReLU (dropout off in eval)
        "prenet_w1": nrm(keys[next(ki)], (num_mels, num_hidden * 2)),
        "prenet_b1": jnp.zeros((1, num_hidden * 2), jnp.float32),
        "prenet_w2": nrm(keys[next(ki)], (num_hidden * 2, num_hidden)),
        "prenet_b2": jnp.zeros((1, num_hidden), jnp.float32),
        # self.norm = Linear(num_hidden, num_hidden * 2)
        "norm_w": nrm(keys[next(ki)], (num_hidden, E)),
        "norm_b": jnp.zeros((1, E), jnp.float32),
        # TokenEmbedding(posmel_size, E): vocab = posmel_size + 1
        "emb_table": nrm(keys[next(ki)], (posmel_size + 1, E), scale=1.0),
    }

    # PositionalEncoding buffer, exactly as in the PyTorch module: (maxlen, 1, E)
    den = jnp.exp(-jnp.arange(0, E, 2, dtype=jnp.float32) * math.log(10000.0) / E)
    pos = jnp.arange(0, maxlen, dtype=jnp.float32).reshape(maxlen, 1)
    pe = jnp.zeros((maxlen, E), jnp.float32)
    pe = pe.at[:, 0::2].set(jnp.sin(pos * den))
    pe = pe.at[:, 1::2].set(jnp.cos(pos * den))
    params["pos_embedding"] = pe[:, None, :]

    layers = []
    for _ in range(num_encoder_layers):
        layers.append({
            "in_proj_w": nrm(keys[next(ki)], (E, 3 * E)),
            "in_proj_b": jnp.zeros((1, 3 * E), jnp.float32),
            "out_proj_w": nrm(keys[next(ki)], (E, E)),
            "out_proj_b": jnp.zeros((1, E), jnp.float32),
            "ln1_g": jnp.ones((1, E), jnp.float32),
            "ln1_b": jnp.zeros((1, E), jnp.float32),
            "ln2_g": jnp.ones((1, E), jnp.float32),
            "ln2_b": jnp.zeros((1, E), jnp.float32),
            "ffn_w1": nrm(keys[next(ki)], (E, FF)),
            "ffn_b1": jnp.zeros((1, FF), jnp.float32),
            "ffn_w2": nrm(keys[next(ki)], (FF, E)),
            "ffn_b2": jnp.zeros((1, E), jnp.float32),
        })
    params["layers"] = layers
    return params


def prepare_params(params, nhead):
    """One-time kernel prep: bf16 weights, 1/sqrt(Dh) folded into the Q columns of
    in_proj, sqrt(E) folded into the (vocab-padded) embedding table.  Biases / LN
    params stay f32 (added to f32 accumulators)."""
    E = params["norm_w"].shape[1]
    scale = 1.0 / math.sqrt(E // nhead)

    def w16(a):
        return a.astype(MATMUL_DTYPE)

    prep = {
        "prenet_w1": w16(params["prenet_w1"]), "prenet_b1": params["prenet_b1"],
        "prenet_w2": w16(params["prenet_w2"]), "prenet_b2": params["prenet_b2"],
        "norm_w": w16(params["norm_w"]), "norm_b": params["norm_b"],
        "pos_embedding": params["pos_embedding"],
    }
    # Embedding table: fold * sqrt(E); pad vocab to a multiple of 8 (MXU-aligned K).
    tbl = params["emb_table"] * math.sqrt(E)
    v = tbl.shape[0]
    v_pad = -(-v // 8) * 8
    prep["emb_table"] = w16(jnp.pad(tbl, ((0, v_pad - v), (0, 0))))

    layers = []
    for lyr in params["layers"]:
        wqkv = lyr["in_proj_w"].at[:, :E].multiply(scale)   # fold 1/sqrt(Dh) into Q cols
        bqkv = lyr["in_proj_b"].at[:, :E].multiply(scale)
        layers.append({
            "in_proj_w": w16(wqkv), "in_proj_b": bqkv,
            "out_proj_w": w16(lyr["out_proj_w"]), "out_proj_b": lyr["out_proj_b"],
            "ln1_g": lyr["ln1_g"], "ln1_b": lyr["ln1_b"],
            "ln2_g": lyr["ln2_g"], "ln2_b": lyr["ln2_b"],
            "ffn_w1": w16(lyr["ffn_w1"]), "ffn_b1": lyr["ffn_b1"],
            "ffn_w2": w16(lyr["ffn_w2"]), "ffn_b2": lyr["ffn_b2"],
        })
    prep["layers"] = layers
    return prep


# ------------------------------ forward pass ------------------------------- #

def mel_encoder_forward(params, mel_input, pos_mel, mel_mask, mel_padding_mask, nhead):
    B, S, _ = mel_input.shape

    # NOTE: faithful to the PyTorch module: pos_embedding is indexed by size(0) == batch
    # (applied pre-transpose), so one PE vector is broadcast over the sequence axis.
    pos_b = params["pos_embedding"][:B]                                  # (B, 1, E)
    ids = pos_mel.astype(jnp.int32).reshape(B, S, 1)                     # gather indices

    # Fused prenet + norm Linear + in-kernel embedding gather + positional add -> bf16.
    x = prenet_embed(mel_input, ids, pos_b, params)                      # (B, S, E)

    # Attention biases kept factored (no (B,S,S) HBM materialisation):
    # additive float attn mask (S,S) rows + key-padding bias (B,1,S).
    attn_mask = mel_mask.astype(jnp.float32)
    pad_bias = jnp.where(mel_padding_mask, jnp.float32(-1e9),
                         jnp.float32(0.0))[:, None, :]

    # TransformerEncoder (post-norm layers, ReLU FFN, dropout off), batch-first layout,
    # activations carried in bf16 between the two pallas_calls per layer.
    for lyr in params["layers"]:
        x = attn_layer(x, attn_mask, pad_bias, lyr, nhead)
        x = ffn_layer(x, lyr)

    return jnp.transpose(x, (1, 0, 2)).astype(jnp.float32)               # (S, B, E) seq-first


# ----------------------------------- main ----------------------------------- #

if __name__ == "__main__":
    # Small, module-consistent shapes.
    B, S = 2, 8
    num_mels = 16          # hp.num_mels
    num_hidden = 16
    embedding_size = 32    # must equal num_hidden * 2 (added to norm output)
    NHEAD = 4
    num_encoder_layers = 2
    dim_feedforward = 64
    posmel_size = 10

    key = jax.random.PRNGKey(0)
    kp, kx, kpos = jax.random.split(key, 3)

    raw_params = init_params(
        kp, num_mels=num_mels, num_hidden=num_hidden, embedding_size=embedding_size,
        posmel_size=posmel_size, nhead=NHEAD, num_encoder_layers=num_encoder_layers,
        dim_feedforward=dim_feedforward, maxlen=5000,
    )
    params = prepare_params(raw_params, NHEAD)

    mel_input = jax.random.normal(kx, (B, S, num_mels), dtype=jnp.float32)
    pos_mel = jax.random.randint(kpos, (B, S), 1, posmel_size + 1, dtype=jnp.int32)
    mel_mask = jnp.zeros((S, S), jnp.float32)                              # additive attn mask
    mel_padding_mask = jnp.zeros((B, S), dtype=bool).at[1, -2:].set(True)  # pad last 2 of batch 1

    memory = mel_encoder_forward(params, mel_input, pos_mel, mel_mask, mel_padding_mask, NHEAD)
    memory = jax.block_until_ready(memory)

    assert memory.shape == (S, B, embedding_size)
    assert bool(jnp.all(jnp.isfinite(memory)))
    print("KERNEL_OK")
</pallas_src>

<mosaic_0001>
module attributes {stable_mosaic.version = 11 : i64} {
  func.func @_prenet_embed_kernel(%arg0: i32, %arg1: i32, %arg2: memref<1x8x16xf32, #tpu.memory_space<vmem>>, %arg3: memref<1x8x1xi32, #tpu.memory_space<vmem>>, %arg4: memref<1x1x32xf32, #tpu.memory_space<vmem>>, %arg5: memref<16x32xbf16, #tpu.memory_space<vmem>>, %arg6: memref<1x32xf32, #tpu.memory_space<vmem>>, %arg7: memref<32x16xbf16, #tpu.memory_space<vmem>>, %arg8: memref<1x16xf32, #tpu.memory_space<vmem>>, %arg9: memref<16x32xbf16, #tpu.memory_space<vmem>>, %arg10: memref<1x32xf32, #tpu.memory_space<vmem>>, %arg11: memref<16x32xbf16, #tpu.memory_space<vmem>>, %arg12: memref<1x8x32xbf16, #tpu.memory_space<vmem>>) attributes {dimension_semantics = [#tpu.dimension_semantics<parallel>, #tpu.dimension_semantics<parallel>], iteration_bounds = array<i64: 2, 1>, scalar_prefetch = 0 : i64, scratch_operands = 0 : i64, tpu.core_type = #tpu.core_type<tc>, window_params = [{transform_indices = @transform_0, window_bounds = array<i64: 1, 8, 16>}, {transform_indices = @transform_1, window_bounds = array<i64: 1, 8, 1>}, {transform_indices = @transform_2, window_bounds = array<i64: 1, 1, 32>}, {pipeline_mode = #tpu.pipeline_mode<synchronous>, transform_indices = @transform_3, window_bounds = array<i64: 16, 32>}, {pipeline_mode = #tpu.pipeline_mode<synchronous>, transform_indices = @transform_4, window_bounds = array<i64: 1, 32>}, {pipeline_mode = #tpu.pipeline_mode<synchronous>, transform_indices = @transform_5, window_bounds = array<i64: 32, 16>}, {pipeline_mode = #tpu.pipeline_mode<synchronous>, transform_indices = @transform_6, window_bounds = array<i64: 1, 16>}, {pipeline_mode = #tpu.pipeline_mode<synchronous>, transform_indices = @transform_7, window_bounds = array<i64: 16, 32>}, {pipeline_mode = #tpu.pipeline_mode<synchronous>, transform_indices = @transform_8, window_bounds = array<i64: 1, 32>}, {pipeline_mode = #tpu.pipeline_mode<synchronous>, transform_indices = @transform_9, window_bounds = array<i64: 16, 32>}, {transform_indices = @transform_10, window_bounds = array<i64: 1, 8, 32>}]} {
    %c0 = arith.constant 0 : index
    %c0_0 = arith.constant 0 : index
    %c0_1 = arith.constant 0 : index
    %0 = vector.load %arg2[%c0, %c0_0, %c0_1] : memref<1x8x16xf32, #tpu.memory_space<vmem>>, vector<1x8x16xf32>
    %1 = vector.shape_cast %0 : vector<1x8x16xf32> to vector<8x16xf32>
    %2 = arith.truncf %1 : vector<8x16xf32> to vector<8x16xbf16>
    %c0_2 = arith.constant 0 : index
    %c0_3 = arith.constant 0 : index
    %3 = vector.load %arg5[%c0_2, %c0_3] : memref<16x32xbf16, #tpu.memory_space<vmem>>, vector<16x32xbf16>
    %cst = arith.constant dense<0.000000e+00> : vector<8x32xf32>
    %4 = tpu.matmul %2, %3, %cst {dimension_numbers = #tpu.dot_dimension_numbers<[1], [0], [0], [1], [0, 0, 1, 1], [], []>} : vector<8x16xbf16>, vector<16x32xbf16>, vector<8x32xf32> -> vector<8x32xf32>
    %c0_4 = arith.constant 0 : index
    %c0_5 = arith.constant 0 : index
    %5 = vector.load %arg6[%c0_4, %c0_5] : memref<1x32xf32, #tpu.memory_space<vmem>>, vector<1x32xf32>
    %6 = vector.broadcast %5 : vector<1x32xf32> to vector<8x32xf32>
    %7 = arith.addf %4, %6 : vector<8x32xf32>
    %cst_6 = arith.constant 0.000000e+00 : f32
    %8 = vector.broadcast %cst_6 : f32 to vector<8x32xf32>
    %9 = arith.maximumf %7, %8 : vector<8x32xf32>
    %10 = arith.truncf %9 : vector<8x32xf32> to vector<8x32xbf16>
    %c0_7 = arith.constant 0 : index
    %c0_8 = arith.constant 0 : index
    %11 = vector.load %arg7[%c0_7, %c0_8] : memref<32x16xbf16, #tpu.memory_space<vmem>>, vector<32x16xbf16>
    %cst_9 = arith.constant dense<0.000000e+00> : vector<8x16xf32>
    %12 = tpu.matmul %10, %11, %cst_9 {dimension_numbers = #tpu.dot_dimension_numbers<[1], [0], [0], [1], [0, 0, 1, 1], [], []>} : vector<8x32xbf16>, vector<32x16xbf16>, vector<8x16xf32> -> vector<8x16xf32>
    %c0_10 = arith.constant 0 : index
    %c0_11 = arith.constant 0 : index
    %13 = vector.load %arg8[%c0_10, %c0_11] : memref<1x16xf32, #tpu.memory_space<vmem>>, vector<1x16xf32>
    %14 = vector.broadcast %13 : vector<1x16xf32> to vector<8x16xf32>
    %15 = arith.addf %12, %14 : vector<8x16xf32>
    %cst_12 = arith.constant 0.000000e+00 : f32
    %16 = vector.broadcast %cst_12 : f32 to vector<8x16xf32>
    %17 = arith.maximumf %15, %16 : vector<8x16xf32>
    %18 = arith.truncf %17 : vector<8x16xf32> to vector<8x16xbf16>
    %c0_13 = arith.constant 0 : index
    %c0_14 = arith.constant 0 : index
    %19 = vector.load %arg9[%c0_13, %c0_14] : memref<16x32xbf16, #tpu.memory_space<vmem>>, vector<16x32xbf16>
    %cst_15 = arith.constant dense<0.000000e+00> : vector<8x32xf32>
    %20 = tpu.matmul %18, %19, %cst_15 {dimension_numbers = #tpu.dot_dimension_numbers<[1], [0], [0], [1], [0, 0, 1, 1], [], []>} : vector<8x16xbf16>, vector<16x32xbf16>, vector<8x32xf32> -> vector<8x32xf32>
    %c0_16 = arith.constant 0 : index
    %c0_17 = arith.constant 0 : index
    %21 = vector.load %arg10[%c0_16, %c0_17] : memref<1x32xf32, #tpu.memory_space<vmem>>, vector<1x32xf32>
    %22 = vector.broadcast %21 : vector<1x32xf32> to vector<8x32xf32>
    %23 = arith.addf %20, %22 : vector<8x32xf32>
    %c0_18 = arith.constant 0 : index
    %c0_19 = arith.constant 0 : index
    %c0_20 = arith.constant 0 : index
    %24 = vector.load %arg3[%c0_18, %c0_19, %c0_20] : memref<1x8x1xi32, #tpu.memory_space<vmem>>, vector<1x8x1xi32>
    %25 = vector.shape_cast %24 : vector<1x8x1xi32> to vector<8x1xi32>
    %26 = tpu.iota {dimensions = array<i32: 1>} : vector<8x16xi32>
    %27 = vector.broadcast %25 : vector<8x1xi32> to vector<8x16xi32>
    %28 = arith.cmpi eq, %27, %26 : vector<8x16xi32>
    %cst_21 = arith.constant 1.000000e+00 : f32
    %cst_22 = arith.constant 0.000000e+00 : f32
    %29 = vector.broadcast %cst_21 : f32 to vector<8x16xf32>
    %30 = vector.broadcast %cst_22 : f32 to vector<8x16xf32>
    %31 = arith.select %28, %29, %30 : vector<8x16xi1>, vector<8x16xf32>
    %32 = arith.truncf %31 : vector<8x16xf32> to vector<8x16xbf16>
    %c0_23 = arith.constant 0 : index
    %c0_24 = arith.constant 0 : index
    %33 = vector.load %arg11[%c0_23, %c0_24] : memref<16x32xbf16, #tpu.memory_space<vmem>>, vector<16x32xbf16>
    %cst_25 = arith.constant dense<0.000000e+00> : vector<8x32xf32>
    %34 = tpu.matmul %32, %33, %cst_25 {dimension_numbers = #tpu.dot_dimension_numbers<[1], [0], [0], [1], [0, 0, 1, 1], [], []>} : vector<8x16xbf16>, vector<16x32xbf16>, vector<8x32xf32> -> vector<8x32xf32>
    %c0_26 = arith.constant 0 : index
    %c0_27 = arith.constant 0 : index
    %c0_28 = arith.constant 0 : index
    %35 = vector.load %arg4[%c0_26, %c0_27, %c0_28] : memref<1x1x32xf32, #tpu.memory_space<vmem>>, vector<1x1x32xf32>
    %36 = vector.shape_cast %35 : vector<1x1x32xf32> to vector<1x32xf32>
    %37 = vector.broadcast %36 : vector<1x32xf32> to vector<8x32xf32>
    %38 = arith.addf %34, %37 : vector<8x32xf32>
    %39 = arith.addf %38, %23 : vector<8x32xf32>
    %40 = arith.truncf %39 : vector<8x32xf32> to vector<8x32xbf16>
    %c0_29 = arith.constant 0 : index
    %c0_30 = arith.constant 0 : index
    %c0_31 = arith.constant 0 : index
    %41 = vector.load %arg12[%c0_29, %c0_30, %c0_31] : memref<1x8x32xbf16, #tpu.memory_space<vmem>>, vector<1x8x32xbf16>
    %42 = vector.shape_cast %41 : vector<1x8x32xbf16> to vector<8x32xbf16>
    %43 = vector.shape_cast %40 : vector<8x32xbf16> to vector<1x8x32xbf16>
    tpu.vector_store %arg12[%c0_29, %c0_30, %c0_31], %43 {strides = array<i32>} : memref<1x8x32xbf16, #tpu.memory_space<vmem>>, vector<1x8x32xbf16>,
    return
  }
  func.func @transform_0(%arg0: i32, %arg1: i32) -> (i32, i32, i32) {
    %c0_i32 = arith.constant 0 : i32
    %c0_i32_0 = arith.constant 0 : i32
    return %arg0, %arg1, %c0_i32 : i32, i32, i32
  }
  func.func @transform_1(%arg0: i32, %arg1: i32) -> (i32, i32, i32) {
    %c0_i32 = arith.constant 0 : i32
    %c0_i32_0 = arith.constant 0 : i32
    return %arg0, %arg1, %c0_i32 : i32, i32, i32
  }
  func.func @transform_2(%arg0: i32, %arg1: i32) -> (i32, i32, i32) {
    %c0_i32 = arith.constant 0 : i32
    %c0_i32_0 = arith.constant 0 : i32
    %c0_i32_1 = arith.constant 0 : i32
    return %arg0, %c0_i32, %c0_i32_0 : i32, i32, i32
  }
  func.func @transform_3(%arg0: i32, %arg1: i32) -> (i32, i32) {
    %c0_i32 = arith.constant 0 : i32
    %c0_i32_0 = arith.constant 0 : i32
    %c0_i32_1 = arith.constant 0 : i32
    return %c0_i32, %c0_i32_0 : i32, i32
  }
  func.func @transform_4(%arg0: i32, %arg1: i32) -> (i32, i32) {
    %c0_i32 = arith.constant 0 : i32
    %c0_i32_0 = arith.constant 0 : i32
    %c0_i32_1 = arith.constant 0 : i32
    return %c0_i32, %c0_i32_0 : i32, i32
  }
  func.func @transform_5(%arg0: i32, %arg1: i32) -> (i32, i32) {
    %c0_i32 = arith.constant 0 : i32
    %c0_i32_0 = arith.constant 0 : i32
    %c0_i32_1 = arith.constant 0 : i32
    return %c0_i32, %c0_i32_0 : i32, i32
  }
  func.func @transform_6(%arg0: i32, %arg1: i32) -> (i32, i32) {
    %c0_i32 = arith.constant 0 : i32
    %c0_i32_0 = arith.constant 0 : i32
    %c0_i32_1 = arith.constant 0 : i32
    return %c0_i32, %c0_i32_0 : i32, i32
  }
  func.func @transform_7(%arg0: i32, %arg1: i32) -> (i32, i32) {
    %c0_i32 = arith.constant 0 : i32
    %c0_i32_0 = arith.constant 0 : i32
    %c0_i32_1 = arith.constant 0 : i32
    return %c0_i32, %c0_i32_0 : i32, i32
  }
  func.func @transform_8(%arg0: i32, %arg1: i32) -> (i32, i32) {
    %c0_i32 = arith.constant 0 : i32
    %c0_i32_0 = arith.constant 0 : i32
    %c0_i32_1 = arith.constant 0 : i32
    return %c0_i32, %c0_i32_0 : i32, i32
  }
  func.func @transform_9(%arg0: i32, %arg1: i32) -> (i32, i32) {
    %c0_i32 = arith.constant 0 : i32
    %c0_i32_0 = arith.constant 0 : i32
    %c0_i32_1 = arith.constant 0 : i32
    return %c0_i32, %c0_i32_0 : i32, i32
  }
  func.func @transform_10(%arg0: i32, %arg1: i32) -> (i32, i32, i32) {
    %c0_i32 = arith.constant 0 : i32
    %c0_i32_0 = arith.constant 0 : i32
    return %arg0, %arg1, %c0_i32 : i32, i32, i32
  }
}

</mosaic_0001>

<llo_original>
// kernel: tpu_custom_call.1
$region0: #{tpu_custom_call.1}
  #allocation0 [shape = 'u32[]', space=smem, size = 0x4, offset = 0x4, fixed_abs, tag = 'smem constant byte address 0x4 - core index']
  #allocation1 [shape = 'u32[144,128]{1,0:T(1,128)}', space=vmem, size = 0x12000, scoped, tag = 'internal scratch']
  %s0 = inlined_call_operand.hbm [shape: f32[2,8,16], index: 0, kind: input, shape index: {}]
  %s1 = inlined_call_operand.hbm [shape: s32[2,8,1], index: 1, kind: input, shape index: {}]
  %s2 = inlined_call_operand.hbm [shape: f32[2,1,32], index: 2, kind: input, shape index: {}]
  %s3 = inlined_call_operand.hbm [shape: bf16[16,32], index: 3, kind: input, shape index: {}]
  %s4 = inlined_call_operand.hbm [shape: f32[1,32], index: 4, kind: input, shape index: {}]
  %s5 = inlined_call_operand.hbm [shape: bf16[32,16], index: 5, kind: input, shape index: {}]
  %s6 = inlined_call_operand.hbm [shape: f32[1,16], index: 6, kind: input, shape index: {}]
  %s7 = inlined_call_operand.hbm [shape: bf16[16,32], index: 7, kind: input, shape index: {}]
  %s8 = inlined_call_operand.hbm [shape: f32[1,32], index: 8, kind: input, shape index: {}]
  %s9 = inlined_call_operand.hbm [shape: bf16[16,32], index: 9, kind: input, shape index: {}]
  %s10 = inlined_call_operand.hbm [shape: bf16[2,8,32], index: 10, kind: output, shape index: {}]
  %s11 = sld [smem:[#allocation0]]
  $region113: #{tpu_custom_call.1} parent=0
    _
  %s13 = ssub.s32 1, %s11
  %s14 = scalar_select 0, %s13, %s11
  $region1: #{tpu_custom_call.1} parent=0
    #allocation2 [shape = 'u8[8192]{0}', space=vmem, size = 0x2000, scoped, tag = 'input window, operand 0']
    #allocation3 [shape = 's32[2]{0}', space=sflag, size = 0x8, scoped, tag = 'scoped memory for tpu_custom_call.1']
    #allocation4 [shape = 's32[2]{0}', space=sflag, size = 0x8, scoped, tag = 'scoped memory for tpu_custom_call.1']
    #allocation5 [shape = 'u8[8192]{0}', space=vmem, size = 0x2000, scoped, tag = 'input window, operand 1']
    #allocation6 [shape = 's32[2]{0}', space=sflag, size = 0x8, scoped, tag = 'scoped memory for tpu_custom_call.1']
    #allocation7 [shape = 'u8[1024]{0}', space=vmem, size = 0x400, scoped, tag = 'input window, operand 2']
    #allocation8 [shape = 'u8[4096]{0}', space=vmem, size = 0x1000, scoped, tag = 'input window, operand 3, single buffered']
    #allocation9 [shape = 's32[1]{0}', space=sflag, size = 0x4, scoped, tag = 'scoped memory for tpu_custom_call.1']
    #allocation10 [shape = 'u8[512]{0}', space=vmem, size = 0x400, scoped, tag = 'input window, operand 4, single buffered']
    #allocation11 [shape = 'u8[8192]{0}', space=vmem, size = 0x2000, scoped, tag = 'input window, operand 5, single buffered']
    #allocation12 [shape = 's32[1]{0}', space=sflag, size = 0x4, scoped, tag = 'scoped memory for tpu_custom_call.1']
    #allocation13 [shape = 'u8[512]{0}', space=vmem, size = 0x400, scoped, tag = 'input window, operand 6, single buffered']
    #allocation14 [shape = 'u8[4096]{0}', space=vmem, size = 0x1000, scoped, tag = 'input window, operand 7, single buffered']
    #allocation15 [shape = 's32[1]{0}', space=sflag, size = 0x4, scoped, tag = 'scoped memory for tpu_custom_call.1']
    #allocation16 [shape = 'u8[512]{0}', space=vmem, size = 0x400, scoped, tag = 'input window, operand 8, single buffered']
    #allocation17 [shape = 'u8[4096]{0}', space=vmem, size = 0x1000, scoped, tag = 'input window, operand 9, single buffered']
    #allocation18 [shape = 's32[1]{0}', space=sflag, size = 0x4, scoped, tag = 'scoped memory for tpu_custom_call.1']
    #allocation19 [shape = 'u8[4096]{0}', space=vmem, size = 0x1000, scoped, tag = 'output window, operand 0']
    %15 = vsyncpa [#allocation3], 0
    %s16 = scalar_lea.sflag [#allocation3], 1
    %17 = vsyncpa %s16, 0
    %18 = vsyncpa [#allocation6], 0
    %s19 = scalar_lea.sflag [#allocation6], 1
    %20 = vsyncpa %s19, 0
    %21 = vsyncpa [#allocation9], 0
    %22 = vsyncpa [#allocation12], 0
    %23 = vsyncpa [#allocation15], 0
    %24 = vsyncpa [#allocation18], 0
    %25 = vsyncpa [#allocation4], 0
    %s26 = scalar_lea.sflag [#allocation4], 1
    %27 = vsyncpa %s26, 0
    loop: start=0, step=1, limit=4
    $region2: #{tpu_custom_call.1} parent=1 // loop_pre_header
      _
    $region3: #{tpu_custom_call.1} parent=1 // loop_header
      %s29 = sphi 0, %s33
      %p30 = scmp.ge.s32.totalorder %s29, 4
      %s36 = sphi 0, %s48
      %s37 = sphi 0, %s44
      %s38 = sphi 0, %s36
      %s39 = sphi 0, %s37
      %s40 = sphi 0, %s38
      %s41 = sphi 0, %s39
      %s53 = sphi 0, %s55
      %s56 = sphi 0, %s53
      %s57 = sphi 0, %s56
      %s73 = sphi 0, %s57
      %s81 = sphi 0, %s83
      %s84 = sphi 0, %s81
      %s85 = sphi 0, %s84
      %s101 = sphi 0, %s85
      %s107 = sphi 0, %s109
      %s110 = sphi 0, %s107
      %s111 = sphi 0, %s110
      %s127 = sphi 0, %s111
      %s131 = sphi 0, %s131
      %s133 = sphi 0, %s131
      %s134 = sphi 0, %s133
      %s148 = sphi 0, %s134
      %s152 = sphi 0, %s152
      %s154 = sphi 0, %s152
      %s155 = sphi 0, %s154
      %s169 = sphi 0, %s155
      %s173 = sphi 0, %s173
      %s175 = sphi 0, %s173
      %s176 = sphi 0, %s175
      %s190 = sphi 0, %s176
      %s194 = sphi 0, %s194
      %s196 = sphi 0, %s194
      %s197 = sphi 0, %s196
      %s211 = sphi 0, %s197
      %s215 = sphi 0, %s215
      %s217 = sphi 0, %s215
      %s218 = sphi 0, %s217
      %s232 = sphi 0, %s218
      %s236 = sphi 0, %s236
      %s238 = sphi 0, %s236
      %s239 = sphi 0, %s238
      %s253 = sphi 0, %s239
      %s257 = sphi 0, %s257
      %s259 = sphi 0, %s257
      %s260 = sphi 0, %s259
      %s274 = sphi 0, %s260
      %s282 = sphi 0, %s284
      %s285 = sphi 0, %s282
      %s286 = sphi 0, %s285
      %s302 = sphi 0, %s286
    $region4: #{tpu_custom_call.1} parent=1 // loop_header_branch
      %32 = sbr.rel (%p30) target = $region8
    $region5: #{tpu_custom_call.1} parent=1 // loop_body
      %s34 = ssub.s32 %s29, 1
      %s35 = ssub.s32 %s29, 2
      %s42 = sadd.s32 1, %s37
      %p43 = scmp.ge.s32.totalorder %s42, 1
      %s44 = scalar_select %p43, 0, %s42
      %s45 = sadd.s32 1, %s36
      %s46 = scalar_select %p43, %s45, %s36
      %p47 = scmp.ge.s32.totalorder %s46, 2
      %s48 = scalar_select %p47, 0, %s46
      %s49 = ssub.s32 %s36, %s48
      %s50 = ssub.s32 %s37, %s44
      %s51 = sor.u32 %s49, %s50
      %p52 = scmp.eq.s32.totalorder %s51, 0
      %s54 = sadd.s32 %s53, 1
      %s55 = scalar_select %p52, %s53, %s54
      %p58 = pneg %p52
      %p59 = scmp.eq.s32.totalorder %s29, 1
      %p60 = por %p58, %p59
      %p61 = scmp.ne.s32.totalorder %s53, %s56
      %p62 = scmp.eq.s32.totalorder %s29, 0
      %p63 = por %p61, %p62
      %p64 = scmp.ne.s32.totalorder %s53, %s56
      %p65 = scmp.eq.s32.totalorder %s34, 1
      %p66 = por %p64, %p65
      %p67 = scmp.ne.s32.totalorder %s56, %s57
      %p68 = scmp.eq.s32.totalorder %s34, 0
      %p69 = por %p67, %p68
      %p70 = scmp.ne.s32.totalorder %s56, %s57
      %p71 = scmp.eq.s32.totalorder %s35, 1
      %p72 = por %p70, %p71
      %p74 = scmp.ne.s32.totalorder %s57, %s73
      %p75 = scmp.eq.s32.totalorder %s35, 0
      %p76 = por %p74, %p75
      %s77 = ssub.s32 %s36, %s48
      %s78 = ssub.s32 %s37, %s44
      %s79 = sor.u32 %s77, %s78
      %p80 = scmp.eq.s32.totalorder %s79, 0
      %s82 = sadd.s32 %s81, 1
      %s83 = scalar_select %p80, %s81, %s82
      %p86 = pneg %p80
      %p87 = scmp.eq.s32.totalorder %s29, 1
      %p88 = por %p86, %p87
      %p89 = scmp.ne.s32.totalorder %s81, %s84
      %p90 = scmp.eq.s32.totalorder %s29, 0
      %p91 = por %p89, %p90
      %p92 = scmp.ne.s32.totalorder %s81, %s84
      %p93 = scmp.eq.s32.totalorder %s34, 1
      %p94 = por %p92, %p93
      %p95 = scmp.ne.s32.totalorder %s84, %s85
      %p96 = scmp.eq.s32.totalorder %s34, 0
      %p97 = por %p95, %p96
      %p98 = scmp.ne.s32.totalorder %s84, %s85
      %p99 = scmp.eq.s32.totalorder %s35, 1
      %p100 = por %p98, %p99
      %p102 = scmp.ne.s32.totalorder %s85, %s101
      %p103 = scmp.eq.s32.totalorder %s35, 0
      %p104 = por %p102, %p103
      %s105 = ssub.s32 %s36, %s48
      %p106 = scmp.eq.s32.totalorder %s105, 0
      %s108 = sadd.s32 %s107, 1
      %s109 = scalar_select %p106, %s107, %s108
      %p112 = pneg %p106
      %p113 = scmp.eq.s32.totalorder %s29, 1
      %p114 = por %p112, %p113
      %p115 = scmp.ne.s32.totalorder %s107, %s110
      %p116 = scmp.eq.s32.totalorder %s29, 0
      %p117 = por %p115, %p116
      %p118 = scmp.ne.s32.totalorder %s107, %s110
      %p119 = scmp.eq.s32.totalorder %s34, 1
      %p120 = por %p118, %p119
      %p121 = scmp.ne.s32.totalorder %s110, %s111
      %p122 = scmp.eq.s32.totalorder %s34, 0
      %p123 = por %p121, %p122
      %p124 = scmp.ne.s32.totalorder %s110, %s111
      %p125 = scmp.eq.s32.totalorder %s35, 1
      %p126 = por %p124, %p125
      %p128 = scmp.ne.s32.totalorder %s111, %s127
      %p129 = scmp.eq.s32.totalorder %s35, 0
      %p130 = por %p128, %p129
      %s132 = sadd.s32 %s131, 1
      %p135 = scmp.eq.s32.totalorder %s29, 1
      %p136 = scmp.ne.s32.totalorder %s131, %s133
      %p137 = scmp.eq.s32.totalorder %s29, 0
      %p138 = por %p136, %p137
      %p139 = scmp.ne.s32.totalorder %s131, %s133
      %p140 = scmp.eq.s32.totalorder %s34, 1
      %p141 = por %p139, %p140
      %p142 = scmp.ne.s32.totalorder %s133, %s134
      %p143 = scmp.eq.s32.totalorder %s34, 0
      %p144 = por %p142, %p143
      %p145 = scmp.ne.s32.totalorder %s133, %s134
      %p146 = scmp.eq.s32.totalorder %s35, 1
      %p147 = por %p145, %p146
      %p149 = scmp.ne.s32.totalorder %s134, %s148
      %p150 = scmp.eq.s32.totalorder %s35, 0
      %p151 = por %p149, %p150
      %s153 = sadd.s32 %s152, 1
      %p156 = scmp.eq.s32.totalorder %s29, 1
      %p157 = scmp.ne.s32.totalorder %s152, %s154
      %p158 = scmp.eq.s32.totalorder %s29, 0
      %p159 = por %p157, %p158
      %p160 = scmp.ne.s32.totalorder %s152, %s154
      %p161 = scmp.eq.s32.totalorder %s34, 1
      %p162 = por %p160, %p161
      %p163 = scmp.ne.s32.totalorder %s154, %s155
      %p164 = scmp.eq.s32.totalorder %s34, 0
      %p165 = por %p163, %p164
      %p166 = scmp.ne.s32.totalorder %s154, %s155
      %p167 = scmp.eq.s32.totalorder %s35, 1
      %p168 = por %p166, %p167
      %p170 = scmp.ne.s32.totalorder %s155, %s169
      %p171 = scmp.eq.s32.totalorder %s35, 0
      %p172 = por %p170, %p171
      %s174 = sadd.s32 %s173, 1
      %p177 = scmp.eq.s32.totalorder %s29, 1
      %p178 = scmp.ne.s32.totalorder %s173, %s175
      %p179 = scmp.eq.s32.totalorder %s29, 0
      %p180 = por %p178, %p179
      %p181 = scmp.ne.s32.totalorder %s173, %s175
      %p182 = scmp.eq.s32.totalorder %s34, 1
      %p183 = por %p181, %p182
      %p184 = scmp.ne.s32.totalorder %s175, %s176
      %p185 = scmp.eq.s32.totalorder %s34, 0
      %p186 = por %p184, %p185
      %p187 = scmp.ne.s32.totalorder %s175, %s176
      %p188 = scmp.eq.s32.totalorder %s35, 1
      %p189 = por %p187, %p188
      %p191 = scmp.ne.s32.totalorder %s176, %s190
      %p192 = scmp.eq.s32.totalorder %s35, 0
      %p193 = por %p191, %p192
      %s195 = sadd.s32 %s194, 1
      %p198 = scmp.eq.s32.totalorder %s29, 1
      %p199 = scmp.ne.s32.totalorder %s194, %s196
      %p200 = scmp.eq.s32.totalorder %s29, 0
      %p201 = por %p199, %p200
      %p202 = scmp.ne.s32.totalorder %s194, %s196
      %p203 = scmp.eq.s32.totalorder %s34, 1
      %p204 = por %p202, %p203
      %p205 = scmp.ne.s32.totalorder %s196, %s197
      %p206 = scmp.eq.s32.totalorder %s34, 0
      %p207 = por %p205, %p206
      %p208 = scmp.ne.s32.totalorder %s196, %s197
      %p209 = scmp.eq.s32.totalorder %s35, 1
      %p210 = por %p208, %p209
      %p212 = scmp.ne.s32.totalorder %s197, %s211
      %p213 = scmp.eq.s32.totalorder %s35, 0
      %p214 = por %p212, %p213
      %s216 = sadd.s32 %s215, 1
      %p219 = scmp.eq.s32.totalorder %s29, 1
      %p220 = scmp.ne.s32.totalorder %s215, %s217
      %p221 = scmp.eq.s32.totalorder %s29, 0
      %p222 = por %p220, %p221
      %p223 = scmp.ne.s32.totalorder %s215, %s217
      %p224 = scmp.eq.s32.totalorder %s34, 1
      %p225 = por %p223, %p224
      %p226 = scmp.ne.s32.totalorder %s217, %s218
      %p227 = scmp.eq.s32.totalorder %s34, 0
      %p228 = por %p226, %p227
      %p229 = scmp.ne.s32.totalorder %s217, %s218
      %p230 = scmp.eq.s32.totalorder %s35, 1
      %p231 = por %p229, %p230
      %p233 = scmp.ne.s32.totalorder %s218, %s232
      %p234 = scmp.eq.s32.totalorder %s35, 0
      %p235 = por %p233, %p234
      %s237 = sadd.s32 %s236, 1
      %p240 = scmp.eq.s32.totalorder %s29, 1
      %p241 = scmp.ne.s32.totalorder %s236, %s238
      %p242 = scmp.eq.s32.totalorder %s29, 0
      %p243 = por %p241, %p242
      %p244 = scmp.ne.s32.totalorder %s236, %s238
      %p245 = scmp.eq.s32.totalorder %s34, 1
      %p246 = por %p244, %p245
      %p247 = scmp.ne.s32.totalorder %s238, %s239
      %p248 = scmp.eq.s32.totalorder %s34, 0
      %p249 = por %p247, %p248
      %p250 = scmp.ne.s32.totalorder %s238, %s239
      %p251 = scmp.eq.s32.totalorder %s35, 1
      %p252 = por %p250, %p251
      %p254 = scmp.ne.s32.totalorder %s239, %s253
      %p255 = scmp.eq.s32.totalorder %s35, 0
      %p256 = por %p254, %p255
      %s258 = sadd.s32 %s257, 1
      %p261 = scmp.eq.s32.totalorder %s29, 1
      %p262 = scmp.ne.s32.totalorder %s257, %s259
      %p263 = scmp.eq.s32.totalorder %s29, 0
      %p264 = por %p262, %p263
      %p265 = scmp.ne.s32.totalorder %s257, %s259
      %p266 = scmp.eq.s32.totalorder %s34, 1
      %p267 = por %p265, %p266
      %p268 = scmp.ne.s32.totalorder %s259, %s260
      %p269 = scmp.eq.s32.totalorder %s34, 0
      %p270 = por %p268, %p269
      %p271 = scmp.ne.s32.totalorder %s259, %s260
      %p272 = scmp.eq.s32.totalorder %s35, 1
      %p273 = por %p271, %p272
      %p275 = scmp.ne.s32.totalorder %s260, %s274
      %p276 = scmp.eq.s32.totalorder %s35, 0
      %p277 = por %p275, %p276
      %s278 = ssub.s32 %s36, %s48
      %s279 = ssub.s32 %s37, %s44
      %s280 = sor.u32 %s278, %s279
      %p281 = scmp.eq.s32.totalorder %s280, 0
      %s283 = sadd.s32 %s282, 1
      %s284 = scalar_select %p281, %s282, %s283
      %p287 = pneg %p281
      %p288 = scmp.eq.s32.totalorder %s29, 1
      %p289 = por %p287, %p288
      %p290 = scmp.ne.s32.totalorder %s282, %s285
      %p291 = scmp.eq.s32.totalorder %s29, 0
      %p292 = por %p290, %p291
      %p293 = scmp.ne.s32.totalorder %s282, %s285
      %p294 = scmp.eq.s32.totalorder %s34, 1
      %p295 = por %p293, %p294
      %p296 = scmp.ne.s32.totalorder %s285, %s286
      %p297 = scmp.eq.s32.totalorder %s34, 0
      %p298 = por %p296, %p297
      %p299 = scmp.ne.s32.totalorder %s285, %s286
      %p300 = scmp.eq.s32.totalorder %s35, 1
      %p301 = por %p299, %p300
      %p303 = scmp.ne.s32.totalorder %s286, %s302
      %p304 = scmp.eq.s32.totalorder %s35, 0
      %p305 = por %p303, %p304
      %p306 = scmp.le.s32.totalorder 1, %s29
      %p307 = scmp.lt.s32.totalorder %s29, 3
      %p308 = pnand %p306, %p307
      %p309 = pneg %p308
      // Predicated region
      $region9: #{tpu_custom_call.1} parent=5 // pred_check
        _
      $region10: #{tpu_custom_call.1} parent=5 // pred_check_branch
        %311 = sbr.rel (%p308) target = $region12
      $region11: #{tpu_custom_call.1} parent=5 // pred_region
        %s312 = ssub.s32 %s29, 1
        // Predicated region
        $region13: #{tpu_custom_call.1} parent=11 // pred_check
          %p313 = pneg %p144
        $region14: #{tpu_custom_call.1} parent=11 // pred_check_branch
          %315 = sbr.rel (%p313) target = $region16
        $region15: #{tpu_custom_call.1} parent=11 // pred_region
          %s317 = ssub.s32 128, 128
          %318 = vsyncadd [#allocation9], %s317
          %s319 = sshll.u32 [#allocation8], 4
          %s320 = int_to_ptr.vmem [resolvable:$true] %s319
          %325 = dma.hbm_to_vmem [thread:$0]  %s3, 128, %s320, [#allocation9], 64, 64, 4
        $region16: #{tpu_custom_call.1} parent=11 // pred_fallthru
          _
        // Predicated region
        $region17: #{tpu_custom_call.1} parent=11 // pred_check
          %p326 = pneg %p165
        $region18: #{tpu_custom_call.1} parent=11 // pred_check_branch
          %328 = sbr.rel (%p326) target = $region20
        $region19: #{tpu_custom_call.1} parent=11 // pred_region
          %s330 = ssub.s32 16, 16
          %331 = vsyncadd [#allocation9], %s330
          %s333 = sshll.u32 [#allocation10], 4
          %s334 = int_to_ptr.vmem [resolvable:$true] %s333
          %336 = dma.hbm_to_vmem [thread:$0]  %s4, 16, %s334, [#allocation9]
        $region20: #{tpu_custom_call.1} parent=11 // pred_fallthru
          _
        // Predicated region
        $region21: #{tpu_custom_call.1} parent=11 // pred_check
          %p337 = pneg %p186
        $region22: #{tpu_custom_call.1} parent=11 // pred_check_branch
          %339 = sbr.rel (%p337) target = $region24
        $region23: #{tpu_custom_call.1} parent=11 // pred_region
          %s341 = ssub.s32 256, 256
          %342 = vsyncadd [#allocation12], %s341
          %s343 = sshll.u32 [#allocation11], 4
          %s344 = int_to_ptr.vmem [resolvable:$true] %s343
          %349 = dma.hbm_to_vmem [thread:$0]  %s5, 256, %s344, [#allocation12], 64, 64, 4
        $region24: #{tpu_custom_call.1} parent=11 // pred_fallthru
          _
        // Predicated region
        $region25: #{tpu_custom_call.1} parent=11 // pred_check
          %p350 = pneg %p207
        $region26: #{tpu_custom_call.1} parent=11 // pred_check_branch
          %352 = sbr.rel (%p350) target = $region28
        $region27: #{tpu_custom_call.1} parent=11 // pred_region
          %s354 = ssub.s32 16, 16
          %355 = vsyncadd [#allocation12], %s354
          %s357 = sshll.u32 [#allocation13], 4
          %s358 = int_to_ptr.vmem [resolvable:$true] %s357
          %360 = dma.hbm_to_vmem [thread:$0]  %s6, 16, %s358, [#allocation12]
        $region28: #{tpu_custom_call.1} parent=11 // pred_fallthru
          _
        // Predicated region
        $region29: #{tpu_custom_call.1} parent=11 // pred_check
          %p361 = pneg %p228
        $region30: #{tpu_custom_call.1} parent=11 // pred_check_branch
          %363 = sbr.rel (%p361) target = $region32
        $region31: #{tpu_custom_call.1} parent=11 // pred_region
          %s365 = ssub.s32 128, 128
          %366 = vsyncadd [#allocation15], %s365
          %s367 = sshll.u32 [#allocation14], 4
          %s368 = int_to_ptr.vmem [resolvable:$true] %s367
          %373 = dma.hbm_to_vmem [thread:$0]  %s7, 128, %s368, [#allocation15], 64, 64, 4
        $region32: #{tpu_custom_call.1} parent=11 // pred_fallthru
          _
        // Predicated region
        $region33: #{tpu_custom_call.1} parent=11 // pred_check
          %p374 = pneg %p249
        $region34: #{tpu_custom_call.1} parent=11 // pred_check_branch
          %376 = sbr.rel (%p374) target = $region36
        $region35: #{tpu_custom_call.1} parent=11 // pred_region
          %s378 = ssub.s32 16, 16
          %379 = vsyncadd [#allocation15], %s378
          %s381 = sshll.u32 [#allocation16], 4
          %s382 = int_to_ptr.vmem [resolvable:$true] %s381
          %384 = dma.hbm_to_vmem [thread:$0]  %s8, 16, %s382, [#allocation15]
        $region36: #{tpu_custom_call.1} parent=11 // pred_fallthru
          _
        // Predicated region
        $region37: #{tpu_custom_call.1} parent=11 // pred_check
          %p385 = pneg %p270
        $region38: #{tpu_custom_call.1} parent=11 // pred_check_branch
          %387 = sbr.rel (%p385) target = $region40
        $region39: #{tpu_custom_call.1} parent=11 // pred_region
          %s389 = ssub.s32 128, 128
          %390 = vsyncadd [#allocation18], %s389
          %s391 = sshll.u32 [#allocation17], 4
          %s392 = int_to_ptr.vmem [resolvable:$true] %s391
          %397 = dma.hbm_to_vmem [thread:$0]  %s9, 128, %s392, [#allocation18], 64, 64, 4
        $region40: #{tpu_custom_call.1} parent=11 // pred_fallthru
          _
      $region12: #{tpu_custom_call.1} parent=5 // pred_fallthru
        _
      %p398 = scmp.lt.s32.totalorder %s29, 2
      // Predicated region
      $region41: #{tpu_custom_call.1} parent=5 // pred_check
        %p399 = pneg %p398
      $region42: #{tpu_custom_call.1} parent=5 // pred_check_branch
        %401 = sbr.rel (%p399) target = $region44
      $region43: #{tpu_custom_call.1} parent=5 // pred_region
        // Predicated region
        $region45: #{tpu_custom_call.1} parent=43 // pred_check
          %p402 = pneg %p63
        $region46: #{tpu_custom_call.1} parent=43 // pred_check_branch
          %404 = sbr.rel (%p402) target = $region48
        $region47: #{tpu_custom_call.1} parent=43 // pred_region
          %s405 = sand.u32 %s53, 1
          %s406 = scalar_lea.sflag [#allocation3], %s405
          %s407 = sand.u32 %s53, 1
          %s408 = smul.addr %s407, 8
          %s409 = scalar_lea.vmem [#allocation2], %s408
          %s411 = ssub.s32 128, 128
          %412 = vsyncadd %s406, %s411
          %s413 = sadd.s32 %s37, %s36
          %s414 = smul.addr %s413, 128
          %s415 = scalar_lea.hbm %s0, %s414
          %s417 = sshll.u32 %s409, 4
          %s418 = int_to_ptr.vmem [resolvable:$true] %s417
          %420 = dma.hbm_to_vmem [thread:$0]  %s415, 128, %s418, %s406
        $region48: #{tpu_custom_call.1} parent=43 // pred_fallthru
          _
        // Predicated region
        $region49: #{tpu_custom_call.1} parent=43 // pred_check
          %p421 = pneg %p91
        $region50: #{tpu_custom_call.1} parent=43 // pred_check_branch
          %423 = sbr.rel (%p421) target = $region52
        $region51: #{tpu_custom_call.1} parent=43 // pred_region
          %s424 = sand.u32 %s29, 1
          %s425 = scalar_lea.sflag [#allocation6], %s424
          %s426 = sand.u32 %s81, 1
          %s427 = smul.addr %s426, 8
          %s428 = scalar_lea.vmem [#allocation5], %s427
          %s430 = ssub.s32 128, 128
          %431 = vsyncadd %s425, %s430
          %s432 = sadd.s32 %s37, %s36
          %s433 = smul.addr %s432, 128
          %s434 = scalar_lea.hbm %s1, %s433
          %s436 = sshll.u32 %s428, 4
          %s437 = int_to_ptr.vmem [resolvable:$true] %s436
          %439 = dma.hbm_to_vmem [thread:$0]  %s434, 128, %s437, %s425
        $region52: #{tpu_custom_call.1} parent=43 // pred_fallthru
          _
        // Predicated region
        $region53: #{tpu_custom_call.1} parent=43 // pred_check
          %p440 = pneg %p117
        $region54: #{tpu_custom_call.1} parent=43 // pred_check_branch
          %442 = sbr.rel (%p440) target = $region56
        $region55: #{tpu_custom_call.1} parent=43 // pred_region
          %s443 = sand.u32 %s29, 1
          %s444 = scalar_lea.sflag [#allocation6], %s443
          %s445 = sand.u32 %s107, 1
          %s446 = scalar_lea.vmem [#allocation7], %s445
          %s448 = ssub.s32 16, 16
          %449 = vsyncadd %s444, %s448
          %s450 = smul.addr %s36, 16
          %s451 = scalar_lea.hbm %s2, %s450
          %s453 = sshll.u32 %s446, 4
          %s454 = int_to_ptr.vmem [resolvable:$true] %s453
          %456 = dma.hbm_to_vmem [thread:$0]  %s451, 16, %s454, %s444
        $region56: #{tpu_custom_call.1} parent=43 // pred_fallthru
          _
      $region44: #{tpu_custom_call.1} parent=5 // pred_fallthru
        _
      %p457 = scmp.le.s32.totalorder 1, %s29
      %p458 = scmp.lt.s32.totalorder %s29, 3
      %p459 = pnand %p457, %p458
      %p460 = pneg %p459
      // Predicated region
      $region57: #{tpu_custom_call.1} parent=5 // pred_check
        _
      $region58: #{tpu_custom_call.1} parent=5 // pred_check_branch
        %462 = sbr.rel (%p459) target = $region60
      $region59: #{tpu_custom_call.1} parent=5 // pred_region
        %s463 = ssub.s32 %s29, 1
        %s464 = sand.u32 %s56, 1
        %s465 = scalar_lea.sflag [#allocation3], %s464
        %s466 = sand.u32 %s56, 1
        %s467 = smul.addr %s466, 8
        %s468 = scalar_lea.vmem [#allocation2], %s467
        // Predicated region
        $region61: #{tpu_custom_call.1} parent=59 // pred_check
          %p469 = pneg %p69
        $region62: #{tpu_custom_call.1} parent=59 // pred_check_branch
          %471 = sbr.rel (%p469) target = $region64
        $region63: #{tpu_custom_call.1} parent=59 // pred_region
          %472 = dma.done %s465, 128
        $region64: #{tpu_custom_call.1} parent=59 // pred_fallthru
          _
        %s473 = sand.u32 %s34, 1
        %s474 = scalar_lea.sflag [#allocation6], %s473
        %s475 = sand.u32 %s84, 1
        %s476 = smul.addr %s475, 8
        %s477 = scalar_lea.vmem [#allocation5], %s476
        // Predicated region
        $region65: #{tpu_custom_call.1} parent=59 // pred_check
          %p478 = pneg %p97
        $region66: #{tpu_custom_call.1} parent=59 // pred_check_branch
          %480 = sbr.rel (%p478) target = $region68
        $region67: #{tpu_custom_call.1} parent=59 // pred_region
          %481 = dma.done %s474, 128
        $region68: #{tpu_custom_call.1} parent=59 // pred_fallthru
          _
        %s482 = sand.u32 %s34, 1
        %s483 = scalar_lea.sflag [#allocation6], %s482
        %s484 = sand.u32 %s110, 1
        %s485 = scalar_lea.vmem [#allocation7], %s484
        // Predicated region
        $region69: #{tpu_custom_call.1} parent=59 // pred_check
          %p486 = pneg %p123
        $region70: #{tpu_custom_call.1} parent=59 // pred_check_branch
          %488 = sbr.rel (%p486) target = $region72
        $region71: #{tpu_custom_call.1} parent=59 // pred_region
          %489 = dma.done %s483, 16
        $region72: #{tpu_custom_call.1} parent=59 // pred_fallthru
          _
        // Predicated region
        $region73: #{tpu_custom_call.1} parent=59 // pred_check
          %p490 = pneg %p144
        $region74: #{tpu_custom_call.1} parent=59 // pred_check_branch
          %492 = sbr.rel (%p490) target = $region76
        $region75: #{tpu_custom_call.1} parent=59 // pred_region
          %493 = dma.done [#allocation9], 128
        $region76: #{tpu_custom_call.1} parent=59 // pred_fallthru
          _
        // Predicated region
        $region77: #{tpu_custom_call.1} parent=59 // pred_check
          %p494 = pneg %p165
        $region78: #{tpu_custom_call.1} parent=59 // pred_check_branch
          %496 = sbr.rel (%p494) target = $region80
        $region79: #{tpu_custom_call.1} parent=59 // pred_region
          %497 = dma.done [#allocation9], 16
        $region80: #{tpu_custom_call.1} parent=59 // pred_fallthru
          _
        // Predicated region
        $region81: #{tpu_custom_call.1} parent=59 // pred_check
          %p498 = pneg %p186
        $region82: #{tpu_custom_call.1} parent=59 // pred_check_branch
          %500 = sbr.rel (%p498) target = $region84
        $region83: #{tpu_custom_call.1} parent=59 // pred_region
          %501 = dma.done [#allocation12], 256
        $region84: #{tpu_custom_call.1} parent=59 // pred_fallthru
          _
        // Predicated region
        $region85: #{tpu_custom_call.1} parent=59 // pred_check
          %p502 = pneg %p207
        $region86: #{tpu_custom_call.1} parent=59 // pred_check_branch
          %504 = sbr.rel (%p502) target = $region88
        $region87: #{tpu_custom_call.1} parent=59 // pred_region
          %505 = dma.done [#allocation12], 16
        $region88: #{tpu_custom_call.1} parent=59 // pred_fallthru
          _
        // Predicated region
        $region89: #{tpu_custom_call.1} parent=59 // pred_check
          %p506 = pneg %p228
        $region90: #{tpu_custom_call.1} parent=59 // pred_check_branch
          %508 = sbr.rel (%p506) target = $region92
        $region91: #{tpu_custom_call.1} parent=59 // pred_region
          %509 = dma.done [#allocation15], 128
        $region92: #{tpu_custom_call.1} parent=59 // pred_fallthru
          _
        // Predicated region
        $region93: #{tpu_custom_call.1} parent=59 // pred_check
          %p510 = pneg %p249
        $region94: #{tpu_custom_call.1} parent=59 // pred_check_branch
          %512 = sbr.rel (%p510) target = $region96
        $region95: #{tpu_custom_call.1} parent=59 // pred_region
          %513 = dma.done [#allocation15], 16
        $region96: #{tpu_custom_call.1} parent=59 // pred_fallthru
          _
        // Predicated region
        $region97: #{tpu_custom_call.1} parent=59 // pred_check
          %p514 = pneg %p270
        $region98: #{tpu_custom_call.1} parent=59 // pred_check_branch
          %516 = sbr.rel (%p514) target = $region100
        $region99: #{tpu_custom_call.1} parent=59 // pred_region
          %517 = dma.done [#allocation18], 128
        $region100: #{tpu_custom_call.1} parent=59 // pred_fallthru
          _
        %s518 = sand.u32 %s56, 1
        %s519 = scalar_lea.sflag [#allocation3], %s518
        %s520 = sand.u32 %s56, 1
        %s521 = smul.addr %s520, 8
        %s522 = scalar_lea.vmem [#allocation2], %s521
        %p523 = pneg %p69
        %p524 = pneg %p66
        %s525 = sand.u32 %s34, 1
        %s526 = scalar_lea.sflag [#allocation6], %s525
        %s527 = sand.u32 %s84, 1
        %s528 = smul.addr %s527, 8
        %s529 = scalar_lea.vmem [#allocation5], %s528
        %p530 = pneg %p97
        %p531 = pneg %p94
        %s532 = sand.u32 %s34, 1
        %s533 = scalar_lea.sflag [#allocation6], %s532
        %s534 = sand.u32 %s110, 1
        %s535 = scalar_lea.vmem [#allocation7], %s534
        %p536 = pneg %p123
        %p537 = pneg %p120
        %p538 = pneg %p144
        %p539 = pneg %p141
        %p540 = pneg %p165
        %p541 = pneg %p162
        %p542 = pneg %p186
        %p543 = pneg %p183
        %p544 = pneg %p207
        %p545 = pneg %p204
        %p546 = pneg %p228
        %p547 = pneg %p225
        %p548 = pneg %p249
        %p549 = pneg %p246
        %p550 = pneg %p270
        %p551 = pneg %p267
        %p552 = pneg %p298
        %p553 = pneg %p295
        %s554 = sand.u32 %s285, 1
        %s555 = scalar_lea.sflag [#allocation4], %s554
        %s556 = sand.u32 %s285, 1
        %s557 = smul.addr %s556, 4
        %s558 = scalar_lea.vmem [#allocation19], %s557
        %v560 = vld [vmem:[%s468] sm:$0xff]
        %v561 = vpack.c.bf16 %v560, %v560
        %v562 = vld [vmem:[#allocation8] sm:$0xf]
        %v563 = vld [vmem:[#allocation8 + $0x4] sm:$0xf]
        %v564 = vld [vmem:[#allocation10] sm:$0x1]
        %v566 = vlaneseq
        %v567 = vshrl.u32 %v566, 7
        %v568 = vsub.s32 0, %v567
        %v569 = vrot.slane %v564, %v568
        %v573 = vunpack.c.l.b16 %v562
        %v574 = vunpack.c.l.b16 %v563
        %v575 = vpack.c.b16 %v574, %v573
        %vm577 = vcmask 130048
        %v579 = vsel %vm577, %v561, 0
        %581 = vmatprep.subr.bf16.mxu0 0
        %582 = vmatpush1.bf16.msra.mxu0 %v575
        %583 = vmatprep.subr.bf16.mxu0 0
        %584 = vmatpush1.bf16.msra.mxu0 0
        %585 = vmatprep.subr.bf16.mxu0 0
        %586 = vmatpush1.bf16.msra.mxu0 0
        %587 = vmatprep.subr.bf16.mxu0 0
        %588 = vmatpush1.bf16.msra.mxu0 0
        %589 = vmatprep.subr.bf16.mxu0 0
        %590 = vmatpush1.bf16.msra.mxu0 0
        %591 = vmatprep.subr.bf16.mxu0 0
        %592 = vmatpush1.bf16.msra.mxu0 0
        %593 = vmatprep.subr.bf16.mxu0 0
        %594 = vmatpush1.bf16.msra.mxu0 0
        %595 = vmatprep.subr.bf16.mxu0 0
        %596 = vmatpush1.bf16.msra.mxu0 0
        %597 = vmatprep.subr.bf16.mxu0 0
        %598 = vmatpush1.bf16.msra.mxu0 0
        %599 = vmatprep.subr.bf16.mxu0 0
        %600 = vmatpush1.bf16.msra.mxu0 0
        %601 = vmatprep.subr.bf16.mxu0 0
        %602 = vmatpush1.bf16.msra.mxu0 0
        %603 = vmatprep.subr.bf16.mxu0 0
        %604 = vmatpush1.bf16.msra.mxu0 0
        %605 = vmatprep.subr.bf16.mxu0 0
        %606 = vmatpush1.bf16.msra.mxu0 0
        %607 = vmatprep.subr.bf16.mxu0 0
        %608 = vmatpush1.bf16.msra.mxu0 0
        %609 = vmatprep.subr.bf16.mxu0 0
        %610 = vmatpush1.bf16.msra.mxu0 0
        %611 = vmatprep.subr.bf16.mxu0 0
        %612 = vmatpush1.bf16.msra.mxu0 0
        %613 = vmatprep.mubr.bf16.mxu0 0
        %614 = vmatmul.mubr.bf16.gmra.mrb[0].mxu0 %v579
        %v615 = vpop.f32.mrb[0].mxu0
        %v616 = vadd.f32 %v569, %v615
        %v617 = vpop.f32.mrb[0].mxu0
        %v618 = vpop.f32.mrb[0].mxu0
        %v619 = vpop.f32.mrb[0].mxu0
        %620 = vdwg.mxu0
        %v621 = vmax.f32 %v616, 0.0
        %v622 = vpack.c.bf16 %v621, %v621
        %v623 = vld [vmem:[#allocation11] sm:$0xf]
        %v624 = vld [vmem:[#allocation11 + $0x4] sm:$0xf]
        %v625 = vld [vmem:[#allocation11 + $0x8] sm:$0xf]
        %v626 = vld [vmem:[#allocation11 + $0xc] sm:$0xf]
        %v627 = vld [vmem:[#allocation13] sm:$0x1]
        %v629 = vlaneseq
        %v630 = vshrl.u32 %v629, 7
        %v631 = vsub.s32 0, %v630
        %v632 = vrot.slane %v627, %v631
        %v638 = vunpack.c.l.b16 %v623
        %v639 = vunpack.c.l.b16 %v624
        %v640 = vunpack.c.l.b16 %v625
        %v641 = vunpack.c.l.b16 %v626
        %v642 = vpack.c.b16 %v639, %v638
        %v643 = vpack.c.b16 %v641, %v640
        %vm646 = vcmask 261120
        %v648 = vsel %vm646, %v622, 0
        %650 = vmatprep.subr.bf16.mxu0 0
        %651 = vmatpush1.bf16.msra.mxu0 %v642
        %652 = vmatprep.subr.bf16.mxu0 0
        %653 = vmatpush1.bf16.msra.mxu0 %v643
        %654 = vmatprep.subr.bf16.mxu0 0
        %655 = vmatpush1.bf16.msra.mxu0 0
        %656 = vmatprep.subr.bf16.mxu0 0
        %657 = vmatpush1.bf16.msra.mxu0 0
        %658 = vmatprep.subr.bf16.mxu0 0
        %659 = vmatpush1.bf16.msra.mxu0 0
        %660 = vmatprep.subr.bf16.mxu0 0
        %661 = vmatpush1.bf16.msra.mxu0 0
        %662 = vmatprep.subr.bf16.mxu0 0
        %663 = vmatpush1.bf16.msra.mxu0 0
        %664 = vmatprep.subr.bf16.mxu0 0
        %665 = vmatpush1.bf16.msra.mxu0 0
        %666 = vmatprep.subr.bf16.mxu0 0
        %667 = vmatpush1.bf16.msra.mxu0 0
        %668 = vmatprep.subr.bf16.mxu0 0
        %669 = vmatpush1.bf16.msra.mxu0 0
        %670 = vmatprep.subr.bf16.mxu0 0
        %671 = vmatpush1.bf16.msra.mxu0 0
        %672 = vmatprep.subr.bf16.mxu0 0
        %673 = vmatpush1.bf16.msra.mxu0 0
        %674 = vmatprep.subr.bf16.mxu0 0
        %675 = vmatpush1.bf16.msra.mxu0 0
        %676 = vmatprep.subr.bf16.mxu0 0
        %677 = vmatpush1.bf16.msra.mxu0 0
        %678 = vmatprep.subr.bf16.mxu0 0
        %679 = vmatpush1.bf16.msra.mxu0 0
        %680 = vmatprep.subr.bf16.mxu0 0
        %681 = vmatpush1.bf16.msra.mxu0 0
        %682 = vmatprep.mubr.bf16.mxu0 0
        %683 = vmatmul.mubr.bf16.gmra.mrb[0].mxu0 %v648
        %v684 = vpop.f32.mrb[0].mxu0
        %v685 = vadd.f32 %v632, %v684
        %v686 = vpop.f32.mrb[0].mxu0
        %v687 = vpop.f32.mrb[0].mxu0
        %v688 = vpop.f32.mrb[0].mxu0
        %689 = vdwg.mxu0
        %v690 = vmax.f32 %v685, 0.0
        %v691 = vpack.c.bf16 %v690, %v690
        %v692 = vld [vmem:[#allocation14] sm:$0xf]
        %v693 = vld [vmem:[#allocation14 + $0x4] sm:$0xf]
        %v694 = vld [vmem:[#allocation16] sm:$0x1]
        %v696 = vlaneseq
        %v697 = vshrl.u32 %v696, 7
        %v698 = vsub.s32 0, %v697
        %v699 = vrot.slane %v694, %v698
        %v703 = vunpack.c.l.b16 %v692
        %v704 = vunpack.c.l.b16 %v693
        %v705 = vpack.c.b16 %v704, %v703
        %v708 = vsel %vm577, %v691, 0
        %710 = vmatprep.subr.bf16.mxu0 0
        %711 = vmatpush1.bf16.msra.mxu0 %v705
        %712 = vmatprep.subr.bf16.mxu0 0
        %713 = vmatpush1.bf16.msra.mxu0 0
        %714 = vmatprep.subr.bf16.mxu0 0
        %715 = vmatpush1.bf16.msra.mxu0 0
        %716 = vmatprep.subr.bf16.mxu0 0
        %717 = vmatpush1.bf16.msra.mxu0 0
        %718 = vmatprep.subr.bf16.mxu0 0
        %719 = vmatpush1.bf16.msra.mxu0 0
        %720 = vmatprep.subr.bf16.mxu0 0
        %721 = vmatpush1.bf16.msra.mxu0 0
        %722 = vmatprep.subr.bf16.mxu0 0
        %723 = vmatpush1.bf16.msra.mxu0 0
        %724 = vmatprep.subr.bf16.mxu0 0
        %725 = vmatpush1.bf16.msra.mxu0 0
        %726 = vmatprep.subr.bf16.mxu0 0
        %727 = vmatpush1.bf16.msra.mxu0 0
        %728 = vmatprep.subr.bf16.mxu0 0
        %729 = vmatpush1.bf16.msra.mxu0 0
        %730 = vmatprep.subr.bf16.mxu0 0
        %731 = vmatpush1.bf16.msra.mxu0 0
        %732 = vmatprep.subr.bf16.mxu0 0
        %733 = vmatpush1.bf16.msra.mxu0 0
        %734 = vmatprep.subr.bf16.mxu0 0
        %735 = vmatpush1.bf16.msra.mxu0 0
        %736 = vmatprep.subr.bf16.mxu0 0
        %737 = vmatpush1.bf16.msra.mxu0 0
        %738 = vmatprep.subr.bf16.mxu0 0
        %739 = vmatpush1.bf16.msra.mxu0 0
        %740 = vmatprep.subr.bf16.mxu0 0
        %741 = vmatpush1.bf16.msra.mxu0 0
        %742 = vmatprep.mubr.bf16.mxu0 0
        %743 = vmatmul.mubr.bf16.gmra.mrb[0].mxu0 %v708
        %v744 = vpop.f32.mrb[0].mxu0
        %v745 = vadd.f32 %v699, %v744
        %v746 = vpop.f32.mrb[0].mxu0
        %v747 = vpop.f32.mrb[0].mxu0
        %v748 = vpop.f32.mrb[0].mxu0
        %749 = vdwg.mxu0
        %v750 = vld [vmem:[%s477] sm:$0xff]
        %v751 = vlaneseq
        %v752 = vand.u32 %v751, 127
        %753 = vset.pattern.permute.xlu0 0
        %754 = vperm.xlu0 %753, %v750
        %v755 = vpop.permute.xlu0 %754
        %vm756 = vcmp.eq.s32.totalorder %v755, %v752
        %v757 = vsel %vm756, 1.0, 0.0
        %v758 = vpack.c.bf16 %v757, %v757
        %v759 = vld [vmem:[#allocation17] sm:$0xf]
        %v760 = vld [vmem:[#allocation17 + $0x4] sm:$0xf]
        %v761 = vld [vmem:[%s485] sm:$0x1]
        %v763 = vlaneseq
        %v764 = vshrl.u32 %v763, 7
        %v765 = vsub.s32 0, %v764
        %v766 = vrot.slane %v761, %v765
        %v770 = vunpack.c.l.b16 %v759
        %v771 = vunpack.c.l.b16 %v760
        %v772 = vpack.c.b16 %v771, %v770
        %v775 = vsel %vm577, %v758, 0
        %777 = vmatprep.subr.bf16.mxu0 0
        %778 = vmatpush1.bf16.msra.mxu0 %v772
        %779 = vmatprep.subr.bf16.mxu0 0
        %780 = vmatpush1.bf16.msra.mxu0 0
        %781 = vmatprep.subr.bf16.mxu0 0
        %782 = vmatpush1.bf16.msra.mxu0 0
        %783 = vmatprep.subr.bf16.mxu0 0
        %784 = vmatpush1.bf16.msra.mxu0 0
        %785 = vmatprep.subr.bf16.mxu0 0
        %786 = vmatpush1.bf16.msra.mxu0 0
        %787 = vmatprep.subr.bf16.mxu0 0
        %788 = vmatpush1.bf16.msra.mxu0 0
        %789 = vmatprep.subr.bf16.mxu0 0
        %790 = vmatpush1.bf16.msra.mxu0 0
        %791 = vmatprep.subr.bf16.mxu0 0
        %792 = vmatpush1.bf16.msra.mxu0 0
        %793 = vmatprep.subr.bf16.mxu0 0
        %794 = vmatpush1.bf16.msra.mxu0 0
        %795 = vmatprep.subr.bf16.mxu0 0
        %796 = vmatpush1.bf16.msra.mxu0 0
        %797 = vmatprep.subr.bf16.mxu0 0
        %798 = vmatpush1.bf16.msra.mxu0 0
        %799 = vmatprep.subr.bf16.mxu0 0
        %800 = vmatpush1.bf16.msra.mxu0 0
        %801 = vmatprep.subr.bf16.mxu0 0
        %802 = vmatpush1.bf16.msra.mxu0 0
        %803 = vmatprep.subr.bf16.mxu0 0
        %804 = vmatpush1.bf16.msra.mxu0 0
        %805 = vmatprep.subr.bf16.mxu0 0
        %806 = vmatpush1.bf16.msra.mxu0 0
        %807 = vmatprep.subr.bf16.mxu0 0
        %808 = vmatpush1.bf16.msra.mxu0 0
        %809 = vmatprep.mubr.bf16.mxu0 0
        %810 = vmatmul.mubr.bf16.gmra.mrb[0].mxu0 %v775
        %v811 = vpop.f32.mrb[0].mxu0
        %v812 = vadd.f32 %v766, %v811
        %v813 = vpop.f32.mrb[0].mxu0
        %v814 = vpop.f32.mrb[0].mxu0
        %v815 = vpop.f32.mrb[0].mxu0
        %816 = vdwg.mxu0
        %v817 = vadd.f32 %v812, %v745
        %v818 = vpack.c.bf16 %v817, %v817
        %vm819 = vcmask 257024
        %820 = vst.msk [vmem:[%s558] sm:$0xf] %vm819, %v818
        %s821 = sand.u32 %s285, 1
        %s822 = scalar_lea.sflag [#allocation4], %s821
        %s823 = sand.u32 %s285, 1
        %s824 = smul.addr %s823, 4
        %s825 = scalar_lea.vmem [#allocation19], %s824
        // Predicated region
        $region101: #{tpu_custom_call.1} parent=59 // pred_check
          %p826 = pneg %p295
        $region102: #{tpu_custom_call.1} parent=59 // pred_check_branch
          %828 = sbr.rel (%p826) target = $region104
        $region103: #{tpu_custom_call.1} parent=59 // pred_region
          %s830 = ssub.s32 64, 64
          %831 = vsyncadd %s822, %s830
          %s832 = sadd.s32 %s39, %s38
          %s833 = smul.addr %s832, 64
          %s834 = scalar_lea.hbm %s10, %s833
          %s836 = sshll.u32 %s825, 4
          %s837 = int_to_ptr.vmem [resolvable:$true] %s836
          %839 = dma.vmem_to_hbm [thread:$0]  %s837, 64, %s834, %s822
        $region104: #{tpu_custom_call.1} parent=59 // pred_fallthru
          _
      $region60: #{tpu_custom_call.1} parent=5 // pred_fallthru
        _
      %p840 = scmp.le.s32.totalorder 2, %s29
      // Predicated region
      $region105: #{tpu_custom_call.1} parent=5 // pred_check
        %p841 = pneg %p840
      $region106: #{tpu_custom_call.1} parent=5 // pred_check_branch
        %843 = sbr.rel (%p841) target = $region108
      $region107: #{tpu_custom_call.1} parent=5 // pred_region
        %s844 = ssub.s32 %s29, 2
        // Predicated region
        $region109: #{tpu_custom_call.1} parent=107 // pred_check
          %p845 = pneg %p301
        $region110: #{tpu_custom_call.1} parent=107 // pred_check_branch
          %847 = sbr.rel (%p845) target = $region112
        $region111: #{tpu_custom_call.1} parent=107 // pred_region
          %s848 = sand.u32 %s286, 1
          %s849 = scalar_lea.sflag [#allocation4], %s848
          %s850 = sand.u32 %s286, 1
          %s851 = smul.addr %s850, 4
          %s852 = scalar_lea.vmem [#allocation19], %s851
          %853 = dma.done %s849, 64
        $region112: #{tpu_custom_call.1} parent=107 // pred_fallthru
          _
      $region108: #{tpu_custom_call.1} parent=5 // pred_fallthru
        _
    $region6: #{tpu_custom_call.1} parent=1 // loop_footer
      %s33 = sadd.s32 1, %s29
    $region7: #{tpu_custom_call.1} parent=1 // loop_footer_branch
      %28 = sbr.rel target = $region3
    $region8: #{tpu_custom_call.1} parent=1 // loop_exit
      _
    %854 = vsyncpa [#allocation3], 1
    %s855 = scalar_lea.sflag [#allocation3], 1
    %856 = vsyncpa %s855, 1
    %857 = vsyncpa [#allocation6], 1
    %s858 = scalar_lea.sflag [#allocation6], 1
    %859 = vsyncpa %s858, 1
    %860 = vsyncpa [#allocation9], 1
    %861 = vsyncpa [#allocation12], 1
    %862 = vsyncpa [#allocation15], 1
    %863 = vsyncpa [#allocation18], 1
    %864 = vsyncpa [#allocation4], 1
    %s865 = scalar_lea.sflag [#allocation4], 1
    %866 = vsyncpa %s865, 1

</llo_original>
